<compile_context>
chip_gen: v5e
topology: v5e:2x2
jax: 0.10.0
libtpu: 0.0.40
codegen_flags: <defaults>
</compile_context>

<pallas_src>
from functools import partial

import jax
import jax.numpy as jnp
from jax.experimental import pallas as pl
from jax.experimental.pallas import tpu as pltpu

_HP = jax.lax.Precision.HIGHEST


def _psiu_body(l, xi, w, W_in_xi, W_in_w, D11T_s, Wz_xi, Wz_w, W_eps):
    """Shared compute: returns [xi_next | u] of shape (B, n_xi + m).

    acc[:, j]  accumulates (C1[j]@xi + D12[j]@w + D11[j]@eps_so_far) / Lam[j]
    out        accumulates xi/w contribution (MXU) + eps contribution (rank-1).
    """
    # Both MXU calls depend only on xi / w -> issue before the serial loop so
    # the MXU latency hides under the tanh recurrence.
    acc = (jnp.dot(xi, W_in_xi, preferred_element_type=jnp.float32, precision=_HP)
           + jnp.dot(w, W_in_w, preferred_element_type=jnp.float32, precision=_HP))
    out = (jnp.dot(xi, Wz_xi, preferred_element_type=jnp.float32, precision=_HP)
           + jnp.dot(w, Wz_w, preferred_element_type=jnp.float32, precision=_HP))

    # Serial recurrence: pure VPU/EUP rank-1 updates, no MXU, no selects.
    # l is small (8) so a static unroll is fine; switch to
    # lax.fori_loop(..., unroll=k) if l grows beyond ~16.
    for i in range(l):
        eps_i = jnp.tanh(acc[:, i:i + 1])            # (B, 1) EUP
        acc = acc + eps_i * D11T_s[i:i + 1, :]       # rank-1 update (state)
        out = out + eps_i * W_eps[i:i + 1, :]        # rank-1 update (output)
    return out


def _psiu_step_kernel(l, xi_ref, w_ref, win_xi_ref, win_w_ref, d11t_ref,
                      wz_xi_ref, wz_w_ref, weps_ref, out_ref):
    out_ref[...] = _psiu_body(
        l, xi_ref[...], w_ref[...], win_xi_ref[...], win_w_ref[...],
        d11t_ref[...], wz_xi_ref[...], wz_w_ref[...], weps_ref[...])


def _psiu_rollout_kernel(l, n_xi, xi0_ref, w_ref, win_xi_ref, win_w_ref,
                         d11t_ref, wz_xi_ref, wz_w_ref, weps_ref,
                         u_ref, xi_out_ref, xi_scr):
    t = pl.program_id(0)

    @pl.when(t == 0)
    def _():
        xi_scr[...] = xi0_ref[...]

    out = _psiu_body(
        l, xi_scr[...], w_ref[...], win_xi_ref[...], win_w_ref[...],
        d11t_ref[...], wz_xi_ref[...], wz_w_ref[...], weps_ref[...])
    xi_next = out[:, :n_xi]
    xi_scr[...] = xi_next                 # carry state across grid steps
    u_ref[...] = out[:, n_xi:]
    xi_out_ref[...] = xi_next


def prepare_psiu_weights(params):
    """Parameter-only algebra, done ONCE per parameter set (outside the step)."""
    (C1, D11, D12, Lam, Fm, B1, B2, Einv, C2, D21, D22) = params
    n_xi = Fm.shape[0]
    m = C2.shape[0]
    l = C1.shape[0]
    n = D12.shape[1]

    inv_lam = (1.0 / Lam)[None, :]                           # (1, l)
    W_in_xi = (C1.T * inv_lam).astype(jnp.float32)           # (n_xi, l)
    W_in_w = (D12.T * inv_lam).astype(jnp.float32)           # (n, l)
    D11T_s = (D11.T * inv_lam).astype(jnp.float32)           # (l, l)

    A_xi = Einv @ Fm                                         # (n_xi, n_xi)
    A_w = Einv @ B2                                          # (n_xi, n)
    A_eps = Einv @ B1                                        # (n_xi, l)
    # out = [xi_next | u]
    Wz_xi = jnp.concatenate([A_xi.T, C2.T], axis=1).astype(jnp.float32)   # (n_xi, n_xi+m)
    Wz_w = jnp.concatenate([A_w.T, D22.T], axis=1).astype(jnp.float32)    # (n, n_xi+m)
    W_eps = jnp.concatenate([A_eps.T, D21.T], axis=1).astype(jnp.float32) # (l, n_xi+m)

    return (W_in_xi, W_in_w, D11T_s, Wz_xi, Wz_w, W_eps, n_xi, n, m, l)


def psiu_step(t, w, xi, weights):
    """One PsiU.forward step.  w: (n,)|(B,n), xi: (n_xi,)|(B,n_xi)."""
    del t  # unused by the reference forward
    (W_in_xi, W_in_w, D11T_s, Wz_xi, Wz_w, W_eps, n_xi, n, m, l) = weights

    single = (w.ndim == 1)
    wb = jnp.atleast_2d(w).astype(jnp.float32)      # (B, n)
    xib = jnp.atleast_2d(xi).astype(jnp.float32)    # (B, n_xi)
    B = wb.shape[0]

    vmem = pl.BlockSpec(memory_space=pltpu.MemorySpace.VMEM)
    out = pl.pallas_call(
        partial(_psiu_step_kernel, l),
        out_shape=jax.ShapeDtypeStruct((B, n_xi + m), jnp.float32),
        in_specs=[vmem] * 8,
        out_specs=vmem,
    )(xib, wb, W_in_xi, W_in_w, D11T_s, Wz_xi, Wz_w, W_eps)

    xi_next = out[:, :n_xi]
    u = out[:, n_xi:]
    if single:
        return u[0], xi_next[0]
    return u, xi_next


def psiu_forward(t, w, xi, params):
    """API-parity convenience: prepares weights then runs one step."""
    return psiu_step(t, w, xi, prepare_psiu_weights(params))


def psiu_rollout(w_seq, xi0, weights):
    """Roll PsiU over a sequence: w_seq (T, B, n), xi0 (B, n_xi).

    Returns u_seq (T, B, m) and xi_seq (T, B, n_xi).  Weights stay VMEM-resident
    across the time grid; xi is carried in a VMEM scratch (no HBM round-trip).
    """
    (W_in_xi, W_in_w, D11T_s, Wz_xi, Wz_w, W_eps, n_xi, n, m, l) = weights
    T, B, _ = w_seq.shape

    def const_spec(arr):
        nd = arr.ndim
        return pl.BlockSpec(arr.shape, lambda t, _nd=nd: (0,) * _nd)

    grid_spec = pltpu.PrefetchScalarGridSpec(
        num_scalar_prefetch=0,
        grid=(T,),
        in_specs=[
            pl.BlockSpec((B, n_xi), lambda t: (0, 0)),          # xi0 (read at t==0)
            pl.BlockSpec((None, B, n), lambda t: (t, 0, 0)),    # w_t streamed in
            const_spec(W_in_xi), const_spec(W_in_w), const_spec(D11T_s),
            const_spec(Wz_xi), const_spec(Wz_w), const_spec(W_eps),
        ],
        out_specs=[
            pl.BlockSpec((None, B, m), lambda t: (t, 0, 0)),    # u_t
            pl.BlockSpec((None, B, n_xi), lambda t: (t, 0, 0)), # xi_t
        ],
        scratch_shapes=[pltpu.VMEM((B, n_xi), jnp.float32)],    # carried state
    )

    u_seq, xi_seq = pl.pallas_call(
        partial(_psiu_rollout_kernel, l, n_xi),
        out_shape=(jax.ShapeDtypeStruct((T, B, m), jnp.float32),
                   jax.ShapeDtypeStruct((T, B, n_xi), jnp.float32)),
        grid_spec=grid_spec,
        compiler_params=pltpu.CompilerParams(dimension_semantics=("arbitrary",)),
    )(xi0.astype(jnp.float32), w_seq.astype(jnp.float32),
      W_in_xi, W_in_w, D11T_s, Wz_xi, Wz_w, W_eps)
    return u_seq, xi_seq


def init_params(key, n, m, n_xi, l, std=0.1):
    """Deterministic parameter init mirroring PsiU.__init__ + set_model_param."""
    ks = jax.random.split(key, 7)
    X = jax.random.normal(ks[0], (2 * n_xi + l, 2 * n_xi + l), jnp.float32) * std
    Y = jax.random.normal(ks[1], (n_xi, n_xi), jnp.float32) * std
    B2 = jax.random.normal(ks[2], (n_xi, n), jnp.float32) * std
    C2 = jax.random.normal(ks[3], (m, n_xi), jnp.float32) * std
    D21 = jax.random.normal(ks[4], (m, l), jnp.float32) * std
    D22 = jax.random.normal(ks[5], (m, n), jnp.float32) * std
    D12 = jax.random.normal(ks[6], (l, n), jnp.float32) * std

    epsilon = 0.001
    H = X.T @ X + epsilon * jnp.eye(2 * n_xi + l, dtype=jnp.float32)
    H11 = H[:n_xi, :n_xi]
    H21 = H[n_xi:n_xi + l, :n_xi]
    H22 = H[n_xi:n_xi + l, n_xi:n_xi + l]
    H31 = H[n_xi + l:, :n_xi]
    H32 = H[n_xi + l:, n_xi:n_xi + l]
    H33 = H[n_xi + l:, n_xi + l:]

    P = H33
    Fm = H31
    B1 = H32
    E = 0.5 * (H11 + P + Y - Y.T)
    Lam = 0.5 * jnp.diag(H22)
    D11 = -jnp.tril(H22, k=-1)
    C1 = -H21
    Einv = jnp.linalg.inv(E)
    return (C1, D11, D12, Lam, Fm, B1, B2, Einv, C2, D21, D22)


def psiu_ref(w, xi, params):
    """Pure-JAX reference, literal transcription of the PyTorch forward."""
    (C1, D11, D12, Lam, Fm, B1, B2, Einv, C2, D21, D22) = params
    l = C1.shape[0]
    eps = jnp.zeros((l,), jnp.float32)
    for i in range(l):
        v = C1[i] @ xi + D11[i] @ eps + D12[i] @ w
        eps = eps.at[i].set(jnp.tanh(v / Lam[i]))
    E_xi = Fm @ xi + B1 @ eps + B2 @ w
    xi_ = Einv @ E_xi
    u = C2 @ xi + D21 @ eps + D22 @ w
    return u, xi_


if __name__ == "__main__":
    n, m, n_xi, l = 4, 2, 8, 8
    key = jax.random.PRNGKey(0)
    kp, kw, kxi, kwb, kxib, kws = jax.random.split(key, 6)

    params = init_params(kp, n, m, n_xi, l)
    weights = prepare_psiu_weights(params)   # parameter algebra: once, not per step
    t = 0.0                                  # unused, kept for signature parity

    # --- single-vector path (exact semantics of the PyTorch module) ---
    w = jax.random.normal(kw, (n,), jnp.float32)
    xi = jax.random.normal(kxi, (n_xi,), jnp.float32)
    u, xi_next = psiu_step(t, w, xi, weights)
    jax.block_until_ready((u, xi_next))

    u_ref, xi_ref_ = psiu_ref(w, xi, params)
    assert u.shape == (m,) and xi_next.shape == (n_xi,)
    assert jnp.allclose(u, u_ref, atol=1e-5, rtol=1e-5)
    assert jnp.allclose(xi_next, xi_ref_, atol=1e-5, rtol=1e-5)

    # --- batched path: 8 independent (w, xi) pairs fill the 8 sublanes ---
    Bsz = 8
    wb = jax.random.normal(kwb, (Bsz, n), jnp.float32)
    xib = jax.random.normal(kxib, (Bsz, n_xi), jnp.float32)
    ub, xib_next = psiu_step(t, wb, xib, weights)
    jax.block_until_ready((ub, xib_next))

    ub_ref, xib_ref = jax.vmap(lambda a, b: psiu_ref(a, b, params))(wb, xib)
    assert ub.shape == (Bsz, m) and xib_next.shape == (Bsz, n_xi)
    assert jnp.allclose(ub, ub_ref, atol=1e-5, rtol=1e-5)
    assert jnp.allclose(xib_next, xib_ref, atol=1e-5, rtol=1e-5)

    # --- rollout path: time grid, weights VMEM-resident, xi carried in scratch ---
    T = 8
    w_seq = jax.random.normal(kws, (T, Bsz, n), jnp.float32)
    u_seq, xi_seq = psiu_rollout(w_seq, xib, weights)
    jax.block_until_ready((u_seq, xi_seq))

    def scan_step(xi_c, w_t):
        u_t, xi_n = jax.vmap(lambda a, b: psiu_ref(a, b, params))(w_t, xi_c)
        return xi_n, (u_t, xi_n)
    _, (u_seq_ref, xi_seq_ref) = jax.lax.scan(scan_step, xib, w_seq)
    assert u_seq.shape == (T, Bsz, m) and xi_seq.shape == (T, Bsz, n_xi)
    assert jnp.allclose(u_seq, u_seq_ref, atol=1e-4, rtol=1e-4)
    assert jnp.allclose(xi_seq, xi_seq_ref, atol=1e-4, rtol=1e-4)

    print("KERNEL_OK")
</pallas_src>

<mosaic_0001>
module attributes {stable_mosaic.version = 11 : i64} {
  func.func @_psiu_step_kernel(%arg0: memref<1x8xf32, #tpu.memory_space<vmem>>, %arg1: memref<1x4xf32, #tpu.memory_space<vmem>>, %arg2: memref<8x8xf32, #tpu.memory_space<vmem>>, %arg3: memref<4x8xf32, #tpu.memory_space<vmem>>, %arg4: memref<8x8xf32, #tpu.memory_space<vmem>>, %arg5: memref<8x10xf32, #tpu.memory_space<vmem>>, %arg6: memref<4x10xf32, #tpu.memory_space<vmem>>, %arg7: memref<8x10xf32, #tpu.memory_space<vmem>>, %arg8: memref<1x10xf32, #tpu.memory_space<vmem>>) attributes {dimension_semantics = [], scalar_prefetch = 0 : i64, scratch_operands = 0 : i64, tpu.core_type = #tpu.core_type<tc>} {
    %c0 = arith.constant 0 : index
    %c0_0 = arith.constant 0 : index
    %0 = vector.load %arg0[%c0, %c0_0] : memref<1x8xf32, #tpu.memory_space<vmem>>, vector<1x8xf32>
    %c0_1 = arith.constant 0 : index
    %c0_2 = arith.constant 0 : index
    %1 = vector.load %arg1[%c0_1, %c0_2] : memref<1x4xf32, #tpu.memory_space<vmem>>, vector<1x4xf32>
    %c0_3 = arith.constant 0 : index
    %c0_4 = arith.constant 0 : index
    %2 = vector.load %arg2[%c0_3, %c0_4] : memref<8x8xf32, #tpu.memory_space<vmem>>, vector<8x8xf32>
    %c0_5 = arith.constant 0 : index
    %c0_6 = arith.constant 0 : index
    %3 = vector.load %arg3[%c0_5, %c0_6] : memref<4x8xf32, #tpu.memory_space<vmem>>, vector<4x8xf32>
    %c0_7 = arith.constant 0 : index
    %c0_8 = arith.constant 0 : index
    %4 = vector.load %arg4[%c0_7, %c0_8] : memref<8x8xf32, #tpu.memory_space<vmem>>, vector<8x8xf32>
    %c0_9 = arith.constant 0 : index
    %c0_10 = arith.constant 0 : index
    %5 = vector.load %arg5[%c0_9, %c0_10] : memref<8x10xf32, #tpu.memory_space<vmem>>, vector<8x10xf32>
    %c0_11 = arith.constant 0 : index
    %c0_12 = arith.constant 0 : index
    %6 = vector.load %arg6[%c0_11, %c0_12] : memref<4x10xf32, #tpu.memory_space<vmem>>, vector<4x10xf32>
    %c0_13 = arith.constant 0 : index
    %c0_14 = arith.constant 0 : index
    %7 = vector.load %arg7[%c0_13, %c0_14] : memref<8x10xf32, #tpu.memory_space<vmem>>, vector<8x10xf32>
    %cst = arith.constant dense<0.000000e+00> : vector<1x8xf32>
    %8 = tpu.matmul %0, %2, %cst {dimension_numbers = #tpu.dot_dimension_numbers<[1], [0], [0], [1], [0, 0, 1, 1], [], []>, precision = #tpu.contract_precision<fp32>} : vector<1x8xf32>, vector<8x8xf32>, vector<1x8xf32> -> vector<1x8xf32>
    %cst_15 = arith.constant dense<0.000000e+00> : vector<1x8xf32>
    %9 = tpu.matmul %1, %3, %cst_15 {dimension_numbers = #tpu.dot_dimension_numbers<[1], [0], [0], [1], [0, 0, 1, 1], [], []>, precision = #tpu.contract_precision<fp32>} : vector<1x4xf32>, vector<4x8xf32>, vector<1x8xf32> -> vector<1x8xf32>
    %10 = arith.addf %8, %9 : vector<1x8xf32>
    %cst_16 = arith.constant dense<0.000000e+00> : vector<1x10xf32>
    %11 = tpu.matmul %0, %5, %cst_16 {dimension_numbers = #tpu.dot_dimension_numbers<[1], [0], [0], [1], [0, 0, 1, 1], [], []>, precision = #tpu.contract_precision<fp32>} : vector<1x8xf32>, vector<8x10xf32>, vector<1x10xf32> -> vector<1x10xf32>
    %cst_17 = arith.constant dense<0.000000e+00> : vector<1x10xf32>
    %12 = tpu.matmul %1, %6, %cst_17 {dimension_numbers = #tpu.dot_dimension_numbers<[1], [0], [0], [1], [0, 0, 1, 1], [], []>, precision = #tpu.contract_precision<fp32>} : vector<1x4xf32>, vector<4x10xf32>, vector<1x10xf32> -> vector<1x10xf32>
    %13 = arith.addf %11, %12 : vector<1x10xf32>
    %14 = vector.extract_strided_slice %10 {offsets = [0, 0], sizes = [1, 1], strides = [1, 1]} : vector<1x8xf32> to vector<1x1xf32>
    %15 = math.tanh %14 : vector<1x1xf32>
    %16 = vector.extract_strided_slice %4 {offsets = [0, 0], sizes = [1, 8], strides = [1, 1]} : vector<8x8xf32> to vector<1x8xf32>
    %17 = vector.broadcast %15 : vector<1x1xf32> to vector<1x8xf32>
    %18 = arith.mulf %17, %16 : vector<1x8xf32>
    %19 = arith.addf %10, %18 : vector<1x8xf32>
    %20 = vector.extract_strided_slice %7 {offsets = [0, 0], sizes = [1, 10], strides = [1, 1]} : vector<8x10xf32> to vector<1x10xf32>
    %21 = vector.broadcast %15 : vector<1x1xf32> to vector<1x10xf32>
    %22 = arith.mulf %21, %20 : vector<1x10xf32>
    %23 = arith.addf %13, %22 : vector<1x10xf32>
    %24 = vector.extract_strided_slice %19 {offsets = [0, 1], sizes = [1, 1], strides = [1, 1]} : vector<1x8xf32> to vector<1x1xf32>
    %25 = math.tanh %24 : vector<1x1xf32>
    %26 = vector.extract_strided_slice %4 {offsets = [1, 0], sizes = [1, 8], strides = [1, 1]} : vector<8x8xf32> to vector<1x8xf32>
    %27 = vector.broadcast %25 : vector<1x1xf32> to vector<1x8xf32>
    %28 = arith.mulf %27, %26 : vector<1x8xf32>
    %29 = arith.addf %19, %28 : vector<1x8xf32>
    %30 = vector.extract_strided_slice %7 {offsets = [1, 0], sizes = [1, 10], strides = [1, 1]} : vector<8x10xf32> to vector<1x10xf32>
    %31 = vector.broadcast %25 : vector<1x1xf32> to vector<1x10xf32>
    %32 = arith.mulf %31, %30 : vector<1x10xf32>
    %33 = arith.addf %23, %32 : vector<1x10xf32>
    %34 = vector.extract_strided_slice %29 {offsets = [0, 2], sizes = [1, 1], strides = [1, 1]} : vector<1x8xf32> to vector<1x1xf32>
    %35 = math.tanh %34 : vector<1x1xf32>
    %36 = vector.extract_strided_slice %4 {offsets = [2, 0], sizes = [1, 8], strides = [1, 1]} : vector<8x8xf32> to vector<1x8xf32>
    %37 = vector.broadcast %35 : vector<1x1xf32> to vector<1x8xf32>
    %38 = arith.mulf %37, %36 : vector<1x8xf32>
    %39 = arith.addf %29, %38 : vector<1x8xf32>
    %40 = vector.extract_strided_slice %7 {offsets = [2, 0], sizes = [1, 10], strides = [1, 1]} : vector<8x10xf32> to vector<1x10xf32>
    %41 = vector.broadcast %35 : vector<1x1xf32> to vector<1x10xf32>
    %42 = arith.mulf %41, %40 : vector<1x10xf32>
    %43 = arith.addf %33, %42 : vector<1x10xf32>
    %44 = vector.extract_strided_slice %39 {offsets = [0, 3], sizes = [1, 1], strides = [1, 1]} : vector<1x8xf32> to vector<1x1xf32>
    %45 = math.tanh %44 : vector<1x1xf32>
    %46 = vector.extract_strided_slice %4 {offsets = [3, 0], sizes = [1, 8], strides = [1, 1]} : vector<8x8xf32> to vector<1x8xf32>
    %47 = vector.broadcast %45 : vector<1x1xf32> to vector<1x8xf32>
    %48 = arith.mulf %47, %46 : vector<1x8xf32>
    %49 = arith.addf %39, %48 : vector<1x8xf32>
    %50 = vector.extract_strided_slice %7 {offsets = [3, 0], sizes = [1, 10], strides = [1, 1]} : vector<8x10xf32> to vector<1x10xf32>
    %51 = vector.broadcast %45 : vector<1x1xf32> to vector<1x10xf32>
    %52 = arith.mulf %51, %50 : vector<1x10xf32>
    %53 = arith.addf %43, %52 : vector<1x10xf32>
    %54 = vector.extract_strided_slice %49 {offsets = [0, 4], sizes = [1, 1], strides = [1, 1]} : vector<1x8xf32> to vector<1x1xf32>
    %55 = math.tanh %54 : vector<1x1xf32>
    %56 = vector.extract_strided_slice %4 {offsets = [4, 0], sizes = [1, 8], strides = [1, 1]} : vector<8x8xf32> to vector<1x8xf32>
    %57 = vector.broadcast %55 : vector<1x1xf32> to vector<1x8xf32>
    %58 = arith.mulf %57, %56 : vector<1x8xf32>
    %59 = arith.addf %49, %58 : vector<1x8xf32>
    %60 = vector.extract_strided_slice %7 {offsets = [4, 0], sizes = [1, 10], strides = [1, 1]} : vector<8x10xf32> to vector<1x10xf32>
    %61 = vector.broadcast %55 : vector<1x1xf32> to vector<1x10xf32>
    %62 = arith.mulf %61, %60 : vector<1x10xf32>
    %63 = arith.addf %53, %62 : vector<1x10xf32>
    %64 = vector.extract_strided_slice %59 {offsets = [0, 5], sizes = [1, 1], strides = [1, 1]} : vector<1x8xf32> to vector<1x1xf32>
    %65 = math.tanh %64 : vector<1x1xf32>
    %66 = vector.extract_strided_slice %4 {offsets = [5, 0], sizes = [1, 8], strides = [1, 1]} : vector<8x8xf32> to vector<1x8xf32>
    %67 = vector.broadcast %65 : vector<1x1xf32> to vector<1x8xf32>
    %68 = arith.mulf %67, %66 : vector<1x8xf32>
    %69 = arith.addf %59, %68 : vector<1x8xf32>
    %70 = vector.extract_strided_slice %7 {offsets = [5, 0], sizes = [1, 10], strides = [1, 1]} : vector<8x10xf32> to vector<1x10xf32>
    %71 = vector.broadcast %65 : vector<1x1xf32> to vector<1x10xf32>
    %72 = arith.mulf %71, %70 : vector<1x10xf32>
    %73 = arith.addf %63, %72 : vector<1x10xf32>
    %74 = vector.extract_strided_slice %69 {offsets = [0, 6], sizes = [1, 1], strides = [1, 1]} : vector<1x8xf32> to vector<1x1xf32>
    %75 = math.tanh %74 : vector<1x1xf32>
    %76 = vector.extract_strided_slice %4 {offsets = [6, 0], sizes = [1, 8], strides = [1, 1]} : vector<8x8xf32> to vector<1x8xf32>
    %77 = vector.broadcast %75 : vector<1x1xf32> to vector<1x8xf32>
    %78 = arith.mulf %77, %76 : vector<1x8xf32>
    %79 = arith.addf %69, %78 : vector<1x8xf32>
    %80 = vector.extract_strided_slice %7 {offsets = [6, 0], sizes = [1, 10], strides = [1, 1]} : vector<8x10xf32> to vector<1x10xf32>
    %81 = vector.broadcast %75 : vector<1x1xf32> to vector<1x10xf32>
    %82 = arith.mulf %81, %80 : vector<1x10xf32>
    %83 = arith.addf %73, %82 : vector<1x10xf32>
    %84 = vector.extract_strided_slice %79 {offsets = [0, 7], sizes = [1, 1], strides = [1, 1]} : vector<1x8xf32> to vector<1x1xf32>
    %85 = math.tanh %84 : vector<1x1xf32>
    %86 = vector.extract_strided_slice %7 {offsets = [7, 0], sizes = [1, 10], strides = [1, 1]} : vector<8x10xf32> to vector<1x10xf32>
    %87 = vector.broadcast %85 : vector<1x1xf32> to vector<1x10xf32>
    %88 = arith.mulf %87, %86 : vector<1x10xf32>
    %89 = arith.addf %83, %88 : vector<1x10xf32>
    %c0_18 = arith.constant 0 : index
    %c0_19 = arith.constant 0 : index
    %90 = vector.load %arg8[%c0_18, %c0_19] : memref<1x10xf32, #tpu.memory_space<vmem>>, vector<1x10xf32>
    tpu.vector_store %arg8[%c0_18, %c0_19], %89 {strides = array<i32>} : memref<1x10xf32, #tpu.memory_space<vmem>>, vector<1x10xf32>,
    return
  }
}

</mosaic_0001>

<llo_original>
// kernel: tpu_custom_call.1
$region0: #{tpu_custom_call.1}
  #allocation0 [shape = 'u32[]', space=smem, size = 0x4, offset = 0x4, fixed_abs, tag = 'smem constant byte address 0x4 - core index']
  #allocation1 [shape = 'u32[72,128]{1,0:T(1,128)}', space=vmem, size = 0x9000, scoped, tag = 'internal scratch']
  %s0 = inlined_call_operand.hbm [shape: f32[1,8], index: 0, kind: input, shape index: {}]
  %s1 = inlined_call_operand.hbm [shape: f32[1,4], index: 1, kind: input, shape index: {}]
  %s2 = inlined_call_operand.hbm [shape: f32[8,8], index: 2, kind: input, shape index: {}]
  %s3 = inlined_call_operand.hbm [shape: f32[4,8], index: 3, kind: input, shape index: {}]
  %s4 = inlined_call_operand.hbm [shape: f32[8,8], index: 4, kind: input, shape index: {}]
  %s5 = inlined_call_operand.hbm [shape: f32[8,10], index: 5, kind: input, shape index: {}]
  %s6 = inlined_call_operand.vmem [shape: f32[4,10], index: 6, kind: input, shape index: {}]
  %s7 = inlined_call_operand.hbm [shape: f32[8,10], index: 7, kind: input, shape index: {}]
  %s8 = inlined_call_operand.hbm [shape: f32[1,10], index: 8, kind: output, shape index: {}]
  %s9 = sld [smem:[#allocation0]]
  $region70: #{tpu_custom_call.1} parent=0
    _
  %s11 = ssub.s32 1, %s9
  %s12 = scalar_select 0, %s11, %s9
  $region1: #{tpu_custom_call.1} parent=0
    #allocation2 [shape = 'u8[512]{0}', space=vmem, size = 0x400, scoped, tag = 'input window, operand 0, single buffered']
    #allocation3 [shape = 's32[1]{0}', space=sflag, size = 0x4, scoped, tag = 'scoped memory for tpu_custom_call.1']
    #allocation4 [shape = 's32[1]{0}', space=sflag, size = 0x4, scoped, tag = 'scoped memory for tpu_custom_call.1']
    #allocation5 [shape = 'u8[512]{0}', space=vmem, size = 0x400, scoped, tag = 'input window, operand 1, single buffered']
    #allocation6 [shape = 's32[1]{0}', space=sflag, size = 0x4, scoped, tag = 'scoped memory for tpu_custom_call.1']
    #allocation7 [shape = 'u8[4096]{0}', space=vmem, size = 0x1000, scoped, tag = 'input window, operand 2, single buffered']
    #allocation8 [shape = 'u8[2048]{0}', space=vmem, size = 0x800, scoped, tag = 'input window, operand 3, single buffered']
    #allocation9 [shape = 's32[1]{0}', space=sflag, size = 0x4, scoped, tag = 'scoped memory for tpu_custom_call.1']
    #allocation10 [shape = 'u8[4096]{0}', space=vmem, size = 0x1000, scoped, tag = 'input window, operand 4, single buffered']
    #allocation11 [shape = 'u8[4096]{0}', space=vmem, size = 0x1000, scoped, tag = 'input window, operand 5, single buffered']
    #allocation12 [shape = 's32[1]{0}', space=sflag, size = 0x4, scoped, tag = 'scoped memory for tpu_custom_call.1']
    #allocation13 [shape = 'u8[4096]{0}', space=vmem, size = 0x1000, scoped, tag = 'input window, operand 7, single buffered']
    #allocation14 [shape = 'u8[512]{0}', space=vmem, size = 0x400, scoped, tag = 'output window, operand 0, single buffered']
    %13 = vsyncpa [#allocation3], 0
    %14 = vsyncpa [#allocation6], 0
    %15 = vsyncpa [#allocation9], 0
    %16 = vsyncpa [#allocation12], 0
    %17 = vsyncpa [#allocation4], 0
    // Predicated region
    $region2: #{tpu_custom_call.1} parent=1 // pred_check
      _
    $region3: #{tpu_custom_call.1} parent=1 // pred_check_branch
      %19 = sbr.rel (0) target = $region5
    $region4: #{tpu_custom_call.1} parent=1 // pred_region
      %21 = vsyncadd [#allocation3], 0
      %s23 = sshll.u32 %s0, 4
      %s24 = int_to_ptr.hbm [resolvable:$true] %s23
      %s25 = sshll.u32 [#allocation2], 4
      %s26 = int_to_ptr.vmem [resolvable:$true] %s25
      %28 = dma.hbm_to_vmem [thread:$0]  %s24, 16, %s26, [#allocation3]
    $region5: #{tpu_custom_call.1} parent=1 // pred_fallthru
      _
    // Predicated region
    $region6: #{tpu_custom_call.1} parent=1 // pred_check
      _
    $region7: #{tpu_custom_call.1} parent=1 // pred_check_branch
      %30 = sbr.rel (0) target = $region9
    $region8: #{tpu_custom_call.1} parent=1 // pred_region
      %32 = vsyncadd [#allocation6], 0
      %s34 = sshll.u32 %s1, 4
      %s35 = int_to_ptr.hbm [resolvable:$true] %s34
      %s36 = sshll.u32 [#allocation5], 4
      %s37 = int_to_ptr.vmem [resolvable:$true] %s36
      %39 = dma.hbm_to_vmem [thread:$0]  %s35, 16, %s37, [#allocation6]
    $region9: #{tpu_custom_call.1} parent=1 // pred_fallthru
      _
    // Predicated region
    $region10: #{tpu_custom_call.1} parent=1 // pred_check
      _
    $region11: #{tpu_custom_call.1} parent=1 // pred_check_branch
      %41 = sbr.rel (0) target = $region13
    $region12: #{tpu_custom_call.1} parent=1 // pred_region
      %43 = vsyncadd [#allocation6], 0
      %s45 = sshll.u32 %s2, 4
      %s46 = int_to_ptr.hbm [resolvable:$true] %s45
      %s47 = sshll.u32 [#allocation7], 4
      %s48 = int_to_ptr.vmem [resolvable:$true] %s47
      %50 = dma.hbm_to_vmem [thread:$0]  %s46, 128, %s48, [#allocation6]
    $region13: #{tpu_custom_call.1} parent=1 // pred_fallthru
      _
    // Predicated region
    $region14: #{tpu_custom_call.1} parent=1 // pred_check
      _
    $region15: #{tpu_custom_call.1} parent=1 // pred_check_branch
      %52 = sbr.rel (0) target = $region17
    $region16: #{tpu_custom_call.1} parent=1 // pred_region
      %54 = vsyncadd [#allocation9], 0
      %s56 = sshll.u32 %s3, 4
      %s57 = int_to_ptr.hbm [resolvable:$true] %s56
      %s58 = sshll.u32 [#allocation8], 4
      %s59 = int_to_ptr.vmem [resolvable:$true] %s58
      %61 = dma.hbm_to_vmem [thread:$0]  %s57, 64, %s59, [#allocation9]
    $region17: #{tpu_custom_call.1} parent=1 // pred_fallthru
      _
    // Predicated region
    $region18: #{tpu_custom_call.1} parent=1 // pred_check
      _
    $region19: #{tpu_custom_call.1} parent=1 // pred_check_branch
      %63 = sbr.rel (0) target = $region21
    $region20: #{tpu_custom_call.1} parent=1 // pred_region
      %65 = vsyncadd [#allocation9], 0
      %s67 = sshll.u32 %s4, 4
      %s68 = int_to_ptr.hbm [resolvable:$true] %s67
      %s69 = sshll.u32 [#allocation10], 4
      %s70 = int_to_ptr.vmem [resolvable:$true] %s69
      %72 = dma.hbm_to_vmem [thread:$0]  %s68, 128, %s70, [#allocation9]
    $region21: #{tpu_custom_call.1} parent=1 // pred_fallthru
      _
    // Predicated region
    $region22: #{tpu_custom_call.1} parent=1 // pred_check
      _
    $region23: #{tpu_custom_call.1} parent=1 // pred_check_branch
      %74 = sbr.rel (0) target = $region25
    $region24: #{tpu_custom_call.1} parent=1 // pred_region
      %76 = vsyncadd [#allocation12], 0
      %s78 = sshll.u32 %s5, 4
      %s79 = int_to_ptr.hbm [resolvable:$true] %s78
      %s80 = sshll.u32 [#allocation11], 4
      %s81 = int_to_ptr.vmem [resolvable:$true] %s80
      %83 = dma.hbm_to_vmem [thread:$0]  %s79, 128, %s81, [#allocation12]
    $region25: #{tpu_custom_call.1} parent=1 // pred_fallthru
      _
    // Predicated region
    $region26: #{tpu_custom_call.1} parent=1 // pred_check
      _
    $region27: #{tpu_custom_call.1} parent=1 // pred_check_branch
      %85 = sbr.rel (0) target = $region29
    $region28: #{tpu_custom_call.1} parent=1 // pred_region
      _
    $region29: #{tpu_custom_call.1} parent=1 // pred_fallthru
      _
    // Predicated region
    $region30: #{tpu_custom_call.1} parent=1 // pred_check
      _
    $region31: #{tpu_custom_call.1} parent=1 // pred_check_branch
      %87 = sbr.rel (0) target = $region33
    $region32: #{tpu_custom_call.1} parent=1 // pred_region
      %89 = vsyncadd [#allocation12], 0
      %s91 = sshll.u32 %s7, 4
      %s92 = int_to_ptr.hbm [resolvable:$true] %s91
      %s93 = sshll.u32 [#allocation13], 4
      %s94 = int_to_ptr.vmem [resolvable:$true] %s93
      %96 = dma.hbm_to_vmem [thread:$0]  %s92, 128, %s94, [#allocation12]
    $region33: #{tpu_custom_call.1} parent=1 // pred_fallthru
      _
    // Predicated region
    $region34: #{tpu_custom_call.1} parent=1 // pred_check
      _
    $region35: #{tpu_custom_call.1} parent=1 // pred_check_branch
      %98 = sbr.rel (0) target = $region37
    $region36: #{tpu_custom_call.1} parent=1 // pred_region
      %100 = dma.done [#allocation3], 16
    $region37: #{tpu_custom_call.1} parent=1 // pred_fallthru
      _
    // Predicated region
    $region38: #{tpu_custom_call.1} parent=1 // pred_check
      _
    $region39: #{tpu_custom_call.1} parent=1 // pred_check_branch
      %102 = sbr.rel (0) target = $region41
    $region40: #{tpu_custom_call.1} parent=1 // pred_region
      %104 = dma.done [#allocation6], 16
    $region41: #{tpu_custom_call.1} parent=1 // pred_fallthru
      _
    // Predicated region
    $region42: #{tpu_custom_call.1} parent=1 // pred_check
      _
    $region43: #{tpu_custom_call.1} parent=1 // pred_check_branch
      %106 = sbr.rel (0) target = $region45
    $region44: #{tpu_custom_call.1} parent=1 // pred_region
      %108 = dma.done [#allocation6], 128
    $region45: #{tpu_custom_call.1} parent=1 // pred_fallthru
      _
    // Predicated region
    $region46: #{tpu_custom_call.1} parent=1 // pred_check
      _
    $region47: #{tpu_custom_call.1} parent=1 // pred_check_branch
      %110 = sbr.rel (0) target = $region49
    $region48: #{tpu_custom_call.1} parent=1 // pred_region
      %112 = dma.done [#allocation9], 64
    $region49: #{tpu_custom_call.1} parent=1 // pred_fallthru
      _
    // Predicated region
    $region50: #{tpu_custom_call.1} parent=1 // pred_check
      _
    $region51: #{tpu_custom_call.1} parent=1 // pred_check_branch
      %114 = sbr.rel (0) target = $region53
    $region52: #{tpu_custom_call.1} parent=1 // pred_region
      %116 = dma.done [#allocation9], 128
    $region53: #{tpu_custom_call.1} parent=1 // pred_fallthru
      _
    // Predicated region
    $region54: #{tpu_custom_call.1} parent=1 // pred_check
      _
    $region55: #{tpu_custom_call.1} parent=1 // pred_check_branch
      %118 = sbr.rel (0) target = $region57
    $region56: #{tpu_custom_call.1} parent=1 // pred_region
      %120 = dma.done [#allocation12], 128
    $region57: #{tpu_custom_call.1} parent=1 // pred_fallthru
      _
    // Predicated region
    $region58: #{tpu_custom_call.1} parent=1 // pred_check
      _
    $region59: #{tpu_custom_call.1} parent=1 // pred_check_branch
      %122 = sbr.rel (0) target = $region61
    $region60: #{tpu_custom_call.1} parent=1 // pred_region
      %124 = dma.done [#allocation12], 128
    $region61: #{tpu_custom_call.1} parent=1 // pred_fallthru
      _
    %v125 = vld [vmem:[#allocation2] sm:$0x1]
    %v126 = vld [vmem:[#allocation5] sm:$0x1]
    %v127 = vld [vmem:[#allocation7] sm:$0xff]
    %v128 = vld [vmem:[#allocation8] sm:$0xf]
    %v129 = vld [vmem:[#allocation10] sm:$0xff]
    %v130 = vld [vmem:[#allocation11] sm:$0xff]
    %v131 = vld [vmem:[%s6] sm:$0xf]
    %v132 = vld [vmem:[#allocation13] sm:$0xff]
    %vm133 = vcmask 31744
    %v135 = vsel %vm133, %v126, 0
    %vm137 = vcmask 1043456
    %v139 = vsel %vm137, %v128, 0
    %141 = vmatpush.msra.mxu0 0.0
    %142 = vmatpush.msra.mxu0 0.0
    %143 = vmatpush.msra.mxu0 0.0
    %144 = vmatpush.msra.mxu0 0.0
    %145 = vmatpush.msra.mxu0 0.0
    %146 = vmatpush.msra.mxu0 0.0
    %147 = vmatpush.msra.mxu0 0.0
    %148 = vmatpush.msra.mxu0 0.0
    %149 = vmatpush.msra.mxu0 0.0
    %150 = vmatpush.msra.mxu0 0.0
    %151 = vmatpush.msra.mxu0 0.0
    %152 = vmatpush.msra.mxu0 0.0
    %153 = vmatpush.msra.mxu0 0.0
    %154 = vmatpush.msra.mxu0 0.0
    %155 = vmatpush.msra.mxu0 0.0
    %v156 = vand.u32 %v139, 4294901760
    %157 = vmatpush.msra.mxu0 %v156
    %v158 = vand.u32 %v135, 4294901760
    %v159 = vsub.f32 %v135, %v158
    %v160 = vand.u32 %v159, 4294901760
    %v161 = vsub.f32 %v159, %v160
    %v162 = vand.u32 %v161, 4294901760
    %163 = vmatmul.f32.gmra.mxu0 %v162
    %v164 = vpop.f32.mrf.mxu0
    %v165 = vadd.f32 0.0, %v164
    %166 = vdwg.mxu0
    %167 = vmatpush.msra.mxu0 0.0
    %168 = vmatpush.msra.mxu0 0.0
    %169 = vmatpush.msra.mxu0 0.0
    %170 = vmatpush.msra.mxu0 0.0
    %171 = vmatpush.msra.mxu0 0.0
    %172 = vmatpush.msra.mxu0 0.0
    %173 = vmatpush.msra.mxu0 0.0
    %174 = vmatpush.msra.mxu0 0.0
    %175 = vmatpush.msra.mxu0 0.0
    %176 = vmatpush.msra.mxu0 0.0
    %177 = vmatpush.msra.mxu0 0.0
    %178 = vmatpush.msra.mxu0 0.0
    %179 = vmatpush.msra.mxu0 0.0
    %180 = vmatpush.msra.mxu0 0.0
    %181 = vmatpush.msra.mxu0 0.0
    %v182 = vand.u32 %v139, 4294901760
    %v183 = vsub.f32 %v139, %v182
    %v184 = vand.u32 %v183, 4294901760
    %v185 = vsub.f32 %v183, %v184
    %v186 = vand.u32 %v185, 4294901760
    %187 = vmatpush.msra.mxu0 %v186
    %v188 = vand.u32 %v135, 4294901760
    %189 = vmatmul.f32.gmra.mxu0 %v188
    %v190 = vpop.f32.mrf.mxu0
    %v191 = vadd.f32 %v165, %v190
    %192 = vdwg.mxu0
    %193 = vmatpush.msra.mxu0 0.0
    %194 = vmatpush.msra.mxu0 0.0
    %195 = vmatpush.msra.mxu0 0.0
    %196 = vmatpush.msra.mxu0 0.0
    %197 = vmatpush.msra.mxu0 0.0
    %198 = vmatpush.msra.mxu0 0.0
    %199 = vmatpush.msra.mxu0 0.0
    %200 = vmatpush.msra.mxu0 0.0
    %201 = vmatpush.msra.mxu0 0.0
    %202 = vmatpush.msra.mxu0 0.0
    %203 = vmatpush.msra.mxu0 0.0
    %204 = vmatpush.msra.mxu0 0.0
    %205 = vmatpush.msra.mxu0 0.0
    %206 = vmatpush.msra.mxu0 0.0
    %207 = vmatpush.msra.mxu0 0.0
    %v208 = vand.u32 %v139, 4294901760
    %v209 = vsub.f32 %v139, %v208
    %210 = vmatpush.msra.mxu0 %v209
    %v211 = vand.u32 %v135, 4294901760
    %v212 = vsub.f32 %v135, %v211
    %213 = vmatmul.f32.gmra.mxu0 %v212
    %v214 = vpop.f32.mrf.mxu0
    %v215 = vadd.f32 %v191, %v214
    %216 = vdwg.mxu0
    %217 = vmatpush.msra.mxu0 0.0
    %218 = vmatpush.msra.mxu0 0.0
    %219 = vmatpush.msra.mxu0 0.0
    %220 = vmatpush.msra.mxu0 0.0
    %221 = vmatpush.msra.mxu0 0.0
    %222 = vmatpush.msra.mxu0 0.0
    %223 = vmatpush.msra.mxu0 0.0
    %224 = vmatpush.msra.mxu0 0.0
    %225 = vmatpush.msra.mxu0 0.0
    %226 = vmatpush.msra.mxu0 0.0
    %227 = vmatpush.msra.mxu0 0.0
    %228 = vmatpush.msra.mxu0 0.0
    %229 = vmatpush.msra.mxu0 0.0
    %230 = vmatpush.msra.mxu0 0.0
    %231 = vmatpush.msra.mxu0 0.0
    %v232 = vand.u32 %v139, 4294901760
    %233 = vmatpush.msra.mxu0 %v232
    %v234 = vand.u32 %v135, 4294901760
    %v235 = vsub.f32 %v135, %v234
    %v236 = vand.u32 %v235, 4294901760
    %237 = vmatmul.f32.gmra.mxu0 %v236
    %v238 = vpop.f32.mrf.mxu0
    %v239 = vadd.f32 %v215, %v238
    %240 = vdwg.mxu0
    %241 = vmatpush.msra.mxu0 0.0
    %242 = vmatpush.msra.mxu0 0.0
    %243 = vmatpush.msra.mxu0 0.0
    %244 = vmatpush.msra.mxu0 0.0
    %245 = vmatpush.msra.mxu0 0.0
    %246 = vmatpush.msra.mxu0 0.0
    %247 = vmatpush.msra.mxu0 0.0
    %248 = vmatpush.msra.mxu0 0.0
    %249 = vmatpush.msra.mxu0 0.0
    %250 = vmatpush.msra.mxu0 0.0
    %251 = vmatpush.msra.mxu0 0.0
    %252 = vmatpush.msra.mxu0 0.0
    %253 = vmatpush.msra.mxu0 0.0
    %254 = vmatpush.msra.mxu0 0.0
    %255 = vmatpush.msra.mxu0 0.0
    %v256 = vand.u32 %v139, 4294901760
    %v257 = vsub.f32 %v139, %v256
    %v258 = vand.u32 %v257, 4294901760
    %259 = vmatpush.msra.mxu0 %v258
    %v260 = vand.u32 %v135, 4294901760
    %261 = vmatmul.f32.gmra.mxu0 %v260
    %v262 = vpop.f32.mrf.mxu0
    %v263 = vadd.f32 %v239, %v262
    %264 = vdwg.mxu0
    %265 = vmatpush.msra.mxu0 0.0
    %266 = vmatpush.msra.mxu0 0.0
    %267 = vmatpush.msra.mxu0 0.0
    %268 = vmatpush.msra.mxu0 0.0
    %269 = vmatpush.msra.mxu0 0.0
    %270 = vmatpush.msra.mxu0 0.0
    %271 = vmatpush.msra.mxu0 0.0
    %272 = vmatpush.msra.mxu0 0.0
    %273 = vmatpush.msra.mxu0 0.0
    %274 = vmatpush.msra.mxu0 0.0
    %275 = vmatpush.msra.mxu0 0.0
    %276 = vmatpush.msra.mxu0 0.0
    %277 = vmatpush.msra.mxu0 0.0
    %278 = vmatpush.msra.mxu0 0.0
    %279 = vmatpush.msra.mxu0 0.0
    %v280 = vand.u32 %v139, 4294901760
    %281 = vmatpush.msra.mxu0 %v280
    %v282 = vand.u32 %v135, 4294901760
    %283 = vmatmul.f32.gmra.mxu0 %v282
    %v284 = vpop.f32.mrf.mxu0
    %v285 = vadd.f32 %v263, %v284
    %286 = vdwg.mxu0
    %vm287 = vcmask 64512
    %v289 = vsel %vm287, %v125, 0
    %291 = vmatpush.msra.mxu0 0.0
    %292 = vmatpush.msra.mxu0 0.0
    %293 = vmatpush.msra.mxu0 0.0
    %294 = vmatpush.msra.mxu0 0.0
    %295 = vmatpush.msra.mxu0 0.0
    %296 = vmatpush.msra.mxu0 0.0
    %297 = vmatpush.msra.mxu0 0.0
    %298 = vmatpush.msra.mxu0 0.0
    %299 = vmatpush.msra.mxu0 0.0
    %300 = vmatpush.msra.mxu0 0.0
    %301 = vmatpush.msra.mxu0 0.0
    %302 = vmatpush.msra.mxu0 0.0
    %303 = vmatpush.msra.mxu0 0.0
    %304 = vmatpush.msra.mxu0 0.0
    %305 = vmatpush.msra.mxu0 0.0
    %v306 = vand.u32 %v127, 4294901760
    %307 = vmatpush.msra.mxu0 %v306
    %v308 = vand.u32 %v289, 4294901760
    %v309 = vsub.f32 %v289, %v308
    %v310 = vand.u32 %v309, 4294901760
    %v311 = vsub.f32 %v309, %v310
    %v312 = vand.u32 %v311, 4294901760
    %313 = vmatmul.f32.gmra.mxu0 %v312
    %v314 = vpop.f32.mrf.mxu0
    %v315 = vadd.f32 %v285, %v314
    %316 = vdwg.mxu0
    %317 = vmatpush.msra.mxu0 0.0
    %318 = vmatpush.msra.mxu0 0.0
    %319 = vmatpush.msra.mxu0 0.0
    %320 = vmatpush.msra.mxu0 0.0
    %321 = vmatpush.msra.mxu0 0.0
    %322 = vmatpush.msra.mxu0 0.0
    %323 = vmatpush.msra.mxu0 0.0
    %324 = vmatpush.msra.mxu0 0.0
    %325 = vmatpush.msra.mxu0 0.0
    %326 = vmatpush.msra.mxu0 0.0
    %327 = vmatpush.msra.mxu0 0.0
    %328 = vmatpush.msra.mxu0 0.0
    %329 = vmatpush.msra.mxu0 0.0
    %330 = vmatpush.msra.mxu0 0.0
    %331 = vmatpush.msra.mxu0 0.0
    %v332 = vand.u32 %v127, 4294901760
    %v333 = vsub.f32 %v127, %v332
    %v334 = vand.u32 %v333, 4294901760
    %v335 = vsub.f32 %v333, %v334
    %v336 = vand.u32 %v335, 4294901760
    %337 = vmatpush.msra.mxu0 %v336
    %v338 = vand.u32 %v289, 4294901760
    %339 = vmatmul.f32.gmra.mxu0 %v338
    %v340 = vpop.f32.mrf.mxu0
    %v341 = vadd.f32 %v315, %v340
    %342 = vdwg.mxu0
    %343 = vmatpush.msra.mxu0 0.0
    %344 = vmatpush.msra.mxu0 0.0
    %345 = vmatpush.msra.mxu0 0.0
    %346 = vmatpush.msra.mxu0 0.0
    %347 = vmatpush.msra.mxu0 0.0
    %348 = vmatpush.msra.mxu0 0.0
    %349 = vmatpush.msra.mxu0 0.0
    %350 = vmatpush.msra.mxu0 0.0
    %351 = vmatpush.msra.mxu0 0.0
    %352 = vmatpush.msra.mxu0 0.0
    %353 = vmatpush.msra.mxu0 0.0
    %354 = vmatpush.msra.mxu0 0.0
    %355 = vmatpush.msra.mxu0 0.0
    %356 = vmatpush.msra.mxu0 0.0
    %357 = vmatpush.msra.mxu0 0.0
    %v358 = vand.u32 %v127, 4294901760
    %v359 = vsub.f32 %v127, %v358
    %360 = vmatpush.msra.mxu0 %v359
    %v361 = vand.u32 %v289, 4294901760
    %v362 = vsub.f32 %v289, %v361
    %363 = vmatmul.f32.gmra.mxu0 %v362
    %v364 = vpop.f32.mrf.mxu0
    %v365 = vadd.f32 %v341, %v364
    %366 = vdwg.mxu0
    %367 = vmatpush.msra.mxu0 0.0
    %368 = vmatpush.msra.mxu0 0.0
    %369 = vmatpush.msra.mxu0 0.0
    %370 = vmatpush.msra.mxu0 0.0
    %371 = vmatpush.msra.mxu0 0.0
    %372 = vmatpush.msra.mxu0 0.0
    %373 = vmatpush.msra.mxu0 0.0
    %374 = vmatpush.msra.mxu0 0.0
    %375 = vmatpush.msra.mxu0 0.0
    %376 = vmatpush.msra.mxu0 0.0
    %377 = vmatpush.msra.mxu0 0.0
    %378 = vmatpush.msra.mxu0 0.0
    %379 = vmatpush.msra.mxu0 0.0
    %380 = vmatpush.msra.mxu0 0.0
    %381 = vmatpush.msra.mxu0 0.0
    %v382 = vand.u32 %v127, 4294901760
    %383 = vmatpush.msra.mxu0 %v382
    %v384 = vand.u32 %v289, 4294901760
    %v385 = vsub.f32 %v289, %v384
    %v386 = vand.u32 %v385, 4294901760
    %387 = vmatmul.f32.gmra.mxu0 %v386
    %v388 = vpop.f32.mrf.mxu0
    %v389 = vadd.f32 %v365, %v388
    %390 = vdwg.mxu0
    %391 = vmatpush.msra.mxu0 0.0
    %392 = vmatpush.msra.mxu0 0.0
    %393 = vmatpush.msra.mxu0 0.0
    %394 = vmatpush.msra.mxu0 0.0
    %395 = vmatpush.msra.mxu0 0.0
    %396 = vmatpush.msra.mxu0 0.0
    %397 = vmatpush.msra.mxu0 0.0
    %398 = vmatpush.msra.mxu0 0.0
    %399 = vmatpush.msra.mxu0 0.0
    %400 = vmatpush.msra.mxu0 0.0
    %401 = vmatpush.msra.mxu0 0.0
    %402 = vmatpush.msra.mxu0 0.0
    %403 = vmatpush.msra.mxu0 0.0
    %404 = vmatpush.msra.mxu0 0.0
    %405 = vmatpush.msra.mxu0 0.0
    %v406 = vand.u32 %v127, 4294901760
    %v407 = vsub.f32 %v127, %v406
    %v408 = vand.u32 %v407, 4294901760
    %409 = vmatpush.msra.mxu0 %v408
    %v410 = vand.u32 %v289, 4294901760
    %411 = vmatmul.f32.gmra.mxu0 %v410
    %v412 = vpop.f32.mrf.mxu0
    %v413 = vadd.f32 %v389, %v412
    %414 = vdwg.mxu0
    %415 = vmatpush.msra.mxu0 0.0
    %416 = vmatpush.msra.mxu0 0.0
    %417 = vmatpush.msra.mxu0 0.0
    %418 = vmatpush.msra.mxu0 0.0
    %419 = vmatpush.msra.mxu0 0.0
    %420 = vmatpush.msra.mxu0 0.0
    %421 = vmatpush.msra.mxu0 0.0
    %422 = vmatpush.msra.mxu0 0.0
    %423 = vmatpush.msra.mxu0 0.0
    %424 = vmatpush.msra.mxu0 0.0
    %425 = vmatpush.msra.mxu0 0.0
    %426 = vmatpush.msra.mxu0 0.0
    %427 = vmatpush.msra.mxu0 0.0
    %428 = vmatpush.msra.mxu0 0.0
    %429 = vmatpush.msra.mxu0 0.0
    %v430 = vand.u32 %v127, 4294901760
    %431 = vmatpush.msra.mxu0 %v430
    %v432 = vand.u32 %v289, 4294901760
    %433 = vmatmul.f32.gmra.mxu0 %v432
    %v434 = vpop.f32.mrf.mxu0
    %v435 = vadd.f32 %v413, %v434
    %436 = vdwg.mxu0
    %v438 = vsel %vm137, %v131, 0
    %440 = vmatpush.msra.mxu0 0.0
    %441 = vmatpush.msra.mxu0 0.0
    %442 = vmatpush.msra.mxu0 0.0
    %443 = vmatpush.msra.mxu0 0.0
    %444 = vmatpush.msra.mxu0 0.0
    %445 = vmatpush.msra.mxu0 0.0
    %446 = vmatpush.msra.mxu0 0.0
    %447 = vmatpush.msra.mxu0 0.0
    %448 = vmatpush.msra.mxu0 0.0
    %449 = vmatpush.msra.mxu0 0.0
    %450 = vmatpush.msra.mxu0 0.0
    %451 = vmatpush.msra.mxu0 0.0
    %452 = vmatpush.msra.mxu0 0.0
    %453 = vmatpush.msra.mxu0 0.0
    %454 = vmatpush.msra.mxu0 0.0
    %v455 = vand.u32 %v438, 4294901760
    %456 = vmatpush.msra.mxu0 %v455
    %v457 = vand.u32 %v135, 4294901760
    %v458 = vsub.f32 %v135, %v457
    %v459 = vand.u32 %v458, 4294901760
    %v460 = vsub.f32 %v458, %v459
    %v461 = vand.u32 %v460, 4294901760
    %462 = vmatmul.f32.gmra.mxu0 %v461
    %v463 = vpop.f32.mrf.mxu0
    %v464 = vadd.f32 0.0, %v463
    %465 = vdwg.mxu0
    %466 = vmatpush.msra.mxu0 0.0
    %467 = vmatpush.msra.mxu0 0.0
    %468 = vmatpush.msra.mxu0 0.0
    %469 = vmatpush.msra.mxu0 0.0
    %470 = vmatpush.msra.mxu0 0.0
    %471 = vmatpush.msra.mxu0 0.0
    %472 = vmatpush.msra.mxu0 0.0
    %473 = vmatpush.msra.mxu0 0.0
    %474 = vmatpush.msra.mxu0 0.0
    %475 = vmatpush.msra.mxu0 0.0
    %476 = vmatpush.msra.mxu0 0.0
    %477 = vmatpush.msra.mxu0 0.0
    %478 = vmatpush.msra.mxu0 0.0
    %479 = vmatpush.msra.mxu0 0.0
    %480 = vmatpush.msra.mxu0 0.0
    %v481 = vand.u32 %v438, 4294901760
    %v482 = vsub.f32 %v438, %v481
    %v483 = vand.u32 %v482, 4294901760
    %v484 = vsub.f32 %v482, %v483
    %v485 = vand.u32 %v484, 4294901760
    %486 = vmatpush.msra.mxu0 %v485
    %v487 = vand.u32 %v135, 4294901760
    %488 = vmatmul.f32.gmra.mxu0 %v487
    %v489 = vpop.f32.mrf.mxu0
    %v490 = vadd.f32 %v464, %v489
    %491 = vdwg.mxu0
    %492 = vmatpush.msra.mxu0 0.0
    %493 = vmatpush.msra.mxu0 0.0
    %494 = vmatpush.msra.mxu0 0.0
    %495 = vmatpush.msra.mxu0 0.0
    %496 = vmatpush.msra.mxu0 0.0
    %497 = vmatpush.msra.mxu0 0.0
    %498 = vmatpush.msra.mxu0 0.0
    %499 = vmatpush.msra.mxu0 0.0
    %500 = vmatpush.msra.mxu0 0.0
    %501 = vmatpush.msra.mxu0 0.0
    %502 = vmatpush.msra.mxu0 0.0
    %503 = vmatpush.msra.mxu0 0.0
    %504 = vmatpush.msra.mxu0 0.0
    %505 = vmatpush.msra.mxu0 0.0
    %506 = vmatpush.msra.mxu0 0.0
    %v507 = vand.u32 %v438, 4294901760
    %v508 = vsub.f32 %v438, %v507
    %509 = vmatpush.msra.mxu0 %v508
    %v510 = vand.u32 %v135, 4294901760
    %v511 = vsub.f32 %v135, %v510
    %512 = vmatmul.f32.gmra.mxu0 %v511
    %v513 = vpop.f32.mrf.mxu0
    %v514 = vadd.f32 %v490, %v513
    %515 = vdwg.mxu0
    %516 = vmatpush.msra.mxu0 0.0
    %517 = vmatpush.msra.mxu0 0.0
    %518 = vmatpush.msra.mxu0 0.0
    %519 = vmatpush.msra.mxu0 0.0
    %520 = vmatpush.msra.mxu0 0.0
    %521 = vmatpush.msra.mxu0 0.0
    %522 = vmatpush.msra.mxu0 0.0
    %523 = vmatpush.msra.mxu0 0.0
    %524 = vmatpush.msra.mxu0 0.0
    %525 = vmatpush.msra.mxu0 0.0
    %526 = vmatpush.msra.mxu0 0.0
    %527 = vmatpush.msra.mxu0 0.0
    %528 = vmatpush.msra.mxu0 0.0
    %529 = vmatpush.msra.mxu0 0.0
    %530 = vmatpush.msra.mxu0 0.0
    %v531 = vand.u32 %v438, 4294901760
    %532 = vmatpush.msra.mxu0 %v531
    %v533 = vand.u32 %v135, 4294901760
    %v534 = vsub.f32 %v135, %v533
    %v535 = vand.u32 %v534, 4294901760
    %536 = vmatmul.f32.gmra.mxu0 %v535
    %v537 = vpop.f32.mrf.mxu0
    %v538 = vadd.f32 %v514, %v537
    %539 = vdwg.mxu0
    %540 = vmatpush.msra.mxu0 0.0
    %541 = vmatpush.msra.mxu0 0.0
    %542 = vmatpush.msra.mxu0 0.0
    %543 = vmatpush.msra.mxu0 0.0
    %544 = vmatpush.msra.mxu0 0.0
    %545 = vmatpush.msra.mxu0 0.0
    %546 = vmatpush.msra.mxu0 0.0
    %547 = vmatpush.msra.mxu0 0.0
    %548 = vmatpush.msra.mxu0 0.0
    %549 = vmatpush.msra.mxu0 0.0
    %550 = vmatpush.msra.mxu0 0.0
    %551 = vmatpush.msra.mxu0 0.0
    %552 = vmatpush.msra.mxu0 0.0
    %553 = vmatpush.msra.mxu0 0.0
    %554 = vmatpush.msra.mxu0 0.0
    %v555 = vand.u32 %v438, 4294901760
    %v556 = vsub.f32 %v438, %v555
    %v557 = vand.u32 %v556, 4294901760
    %558 = vmatpush.msra.mxu0 %v557
    %v559 = vand.u32 %v135, 4294901760
    %560 = vmatmul.f32.gmra.mxu0 %v559
    %v561 = vpop.f32.mrf.mxu0
    %v562 = vadd.f32 %v538, %v561
    %563 = vdwg.mxu0
    %564 = vmatpush.msra.mxu0 0.0
    %565 = vmatpush.msra.mxu0 0.0
    %566 = vmatpush.msra.mxu0 0.0
    %567 = vmatpush.msra.mxu0 0.0
    %568 = vmatpush.msra.mxu0 0.0
    %569 = vmatpush.msra.mxu0 0.0
    %570 = vmatpush.msra.mxu0 0.0
    %571 = vmatpush.msra.mxu0 0.0
    %572 = vmatpush.msra.mxu0 0.0
    %573 = vmatpush.msra.mxu0 0.0
    %574 = vmatpush.msra.mxu0 0.0
    %575 = vmatpush.msra.mxu0 0.0
    %576 = vmatpush.msra.mxu0 0.0
    %577 = vmatpush.msra.mxu0 0.0
    %578 = vmatpush.msra.mxu0 0.0
    %v579 = vand.u32 %v438, 4294901760
    %580 = vmatpush.msra.mxu0 %v579
    %v581 = vand.u32 %v135, 4294901760
    %582 = vmatmul.f32.gmra.mxu0 %v581
    %v583 = vpop.f32.mrf.mxu0
    %v584 = vadd.f32 %v562, %v583
    %585 = vdwg.mxu0
    %586 = vmatpush.msra.mxu0 0.0
    %587 = vmatpush.msra.mxu0 0.0
    %588 = vmatpush.msra.mxu0 0.0
    %589 = vmatpush.msra.mxu0 0.0
    %590 = vmatpush.msra.mxu0 0.0
    %591 = vmatpush.msra.mxu0 0.0
    %592 = vmatpush.msra.mxu0 0.0
    %593 = vmatpush.msra.mxu0 0.0
    %594 = vmatpush.msra.mxu0 0.0
    %595 = vmatpush.msra.mxu0 0.0
    %596 = vmatpush.msra.mxu0 0.0
    %597 = vmatpush.msra.mxu0 0.0
    %598 = vmatpush.msra.mxu0 0.0
    %599 = vmatpush.msra.mxu0 0.0
    %600 = vmatpush.msra.mxu0 0.0
    %v601 = vand.u32 %v130, 4294901760
    %602 = vmatpush.msra.mxu0 %v601
    %v603 = vand.u32 %v289, 4294901760
    %v604 = vsub.f32 %v289, %v603
    %v605 = vand.u32 %v604, 4294901760
    %v606 = vsub.f32 %v604, %v605
    %v607 = vand.u32 %v606, 4294901760
    %608 = vmatmul.f32.gmra.mxu0 %v607
    %v609 = vpop.f32.mrf.mxu0
    %v610 = vadd.f32 %v584, %v609
    %611 = vdwg.mxu0
    %612 = vmatpush.msra.mxu0 0.0
    %613 = vmatpush.msra.mxu0 0.0
    %614 = vmatpush.msra.mxu0 0.0
    %615 = vmatpush.msra.mxu0 0.0
    %616 = vmatpush.msra.mxu0 0.0
    %617 = vmatpush.msra.mxu0 0.0
    %618 = vmatpush.msra.mxu0 0.0
    %619 = vmatpush.msra.mxu0 0.0
    %620 = vmatpush.msra.mxu0 0.0
    %621 = vmatpush.msra.mxu0 0.0
    %622 = vmatpush.msra.mxu0 0.0
    %623 = vmatpush.msra.mxu0 0.0
    %624 = vmatpush.msra.mxu0 0.0
    %625 = vmatpush.msra.mxu0 0.0
    %626 = vmatpush.msra.mxu0 0.0
    %v627 = vand.u32 %v130, 4294901760
    %v628 = vsub.f32 %v130, %v627
    %v629 = vand.u32 %v628, 4294901760
    %v630 = vsub.f32 %v628, %v629
    %v631 = vand.u32 %v630, 4294901760
    %632 = vmatpush.msra.mxu0 %v631
    %v633 = vand.u32 %v289, 4294901760
    %634 = vmatmul.f32.gmra.mxu0 %v633
    %v635 = vpop.f32.mrf.mxu0
    %v636 = vadd.f32 %v610, %v635
    %637 = vdwg.mxu0
    %638 = vmatpush.msra.mxu0 0.0
    %639 = vmatpush.msra.mxu0 0.0
    %640 = vmatpush.msra.mxu0 0.0
    %641 = vmatpush.msra.mxu0 0.0
    %642 = vmatpush.msra.mxu0 0.0
    %643 = vmatpush.msra.mxu0 0.0
    %644 = vmatpush.msra.mxu0 0.0
    %645 = vmatpush.msra.mxu0 0.0
    %646 = vmatpush.msra.mxu0 0.0
    %647 = vmatpush.msra.mxu0 0.0
    %648 = vmatpush.msra.mxu0 0.0
    %649 = vmatpush.msra.mxu0 0.0
    %650 = vmatpush.msra.mxu0 0.0
    %651 = vmatpush.msra.mxu0 0.0
    %652 = vmatpush.msra.mxu0 0.0
    %v653 = vand.u32 %v130, 4294901760
    %v654 = vsub.f32 %v130, %v653
    %655 = vmatpush.msra.mxu0 %v654
    %v656 = vand.u32 %v289, 4294901760
    %v657 = vsub.f32 %v289, %v656
    %658 = vmatmul.f32.gmra.mxu0 %v657
    %v659 = vpop.f32.mrf.mxu0
    %v660 = vadd.f32 %v636, %v659
    %661 = vdwg.mxu0
    %662 = vmatpush.msra.mxu0 0.0
    %663 = vmatpush.msra.mxu0 0.0
    %664 = vmatpush.msra.mxu0 0.0
    %665 = vmatpush.msra.mxu0 0.0
    %666 = vmatpush.msra.mxu0 0.0
    %667 = vmatpush.msra.mxu0 0.0
    %668 = vmatpush.msra.mxu0 0.0
    %669 = vmatpush.msra.mxu0 0.0
    %670 = vmatpush.msra.mxu0 0.0
    %671 = vmatpush.msra.mxu0 0.0
    %672 = vmatpush.msra.mxu0 0.0
    %673 = vmatpush.msra.mxu0 0.0
    %674 = vmatpush.msra.mxu0 0.0
    %675 = vmatpush.msra.mxu0 0.0
    %676 = vmatpush.msra.mxu0 0.0
    %v677 = vand.u32 %v130, 4294901760
    %678 = vmatpush.msra.mxu0 %v677
    %v679 = vand.u32 %v289, 4294901760
    %v680 = vsub.f32 %v289, %v679
    %v681 = vand.u32 %v680, 4294901760
    %682 = vmatmul.f32.gmra.mxu0 %v681
    %v683 = vpop.f32.mrf.mxu0
    %v684 = vadd.f32 %v660, %v683
    %685 = vdwg.mxu0
    %686 = vmatpush.msra.mxu0 0.0
    %687 = vmatpush.msra.mxu0 0.0
    %688 = vmatpush.msra.mxu0 0.0
    %689 = vmatpush.msra.mxu0 0.0
    %690 = vmatpush.msra.mxu0 0.0
    %691 = vmatpush.msra.mxu0 0.0
    %692 = vmatpush.msra.mxu0 0.0
    %693 = vmatpush.msra.mxu0 0.0
    %694 = vmatpush.msra.mxu0 0.0
    %695 = vmatpush.msra.mxu0 0.0
    %696 = vmatpush.msra.mxu0 0.0
    %697 = vmatpush.msra.mxu0 0.0
    %698 = vmatpush.msra.mxu0 0.0
    %699 = vmatpush.msra.mxu0 0.0
    %700 = vmatpush.msra.mxu0 0.0
    %v701 = vand.u32 %v130, 4294901760
    %v702 = vsub.f32 %v130, %v701
    %v703 = vand.u32 %v702, 4294901760
    %704 = vmatpush.msra.mxu0 %v703
    %v705 = vand.u32 %v289, 4294901760
    %706 = vmatmul.f32.gmra.mxu0 %v705
    %v707 = vpop.f32.mrf.mxu0
    %v708 = vadd.f32 %v684, %v707
    %709 = vdwg.mxu0
    %710 = vmatpush.msra.mxu0 0.0
    %711 = vmatpush.msra.mxu0 0.0
    %712 = vmatpush.msra.mxu0 0.0
    %713 = vmatpush.msra.mxu0 0.0
    %714 = vmatpush.msra.mxu0 0.0
    %715 = vmatpush.msra.mxu0 0.0
    %716 = vmatpush.msra.mxu0 0.0
    %717 = vmatpush.msra.mxu0 0.0
    %718 = vmatpush.msra.mxu0 0.0
    %719 = vmatpush.msra.mxu0 0.0
    %720 = vmatpush.msra.mxu0 0.0
    %721 = vmatpush.msra.mxu0 0.0
    %722 = vmatpush.msra.mxu0 0.0
    %723 = vmatpush.msra.mxu0 0.0
    %724 = vmatpush.msra.mxu0 0.0
    %v725 = vand.u32 %v130, 4294901760
    %726 = vmatpush.msra.mxu0 %v725
    %v727 = vand.u32 %v289, 4294901760
    %728 = vmatmul.f32.gmra.mxu0 %v727
    %v729 = vpop.f32.mrf.mxu0
    %v730 = vadd.f32 %v708, %v729
    %731 = vdwg.mxu0
    %v732 = vtanh.pop %v435
    %734 = vset.pattern.permute.xlu0 0
    %735 = vperm.xlu0 %734, %v732
    %v736 = vpop.permute.xlu0 %735
    %v738 = vmul.f32 %v736, %v129
    %v739 = vadd.f32 %v435, %v738
    %v740 = vmul.f32 %v736, %v132
    %v741 = vadd.f32 %v730, %v740
    %v742 = vtanh.pop %v739
    %744 = vset.pattern.permute.xlu0 1
    %745 = vperm.xlu0 %744, %v742
    %v746 = vpop.permute.xlu0 %745
    %v749 = vrot.slane %v129, 1
    %v751 = vmul.f32 %v746, %v749
    %v752 = vadd.f32 %v739, %v751
    %v754 = vrot.slane %v132, 1
    %v756 = vmul.f32 %v746, %v754
    %v757 = vadd.f32 %v741, %v756
    %v758 = vtanh.pop %v752
    %760 = vset.pattern.permute.xlu0 2
    %761 = vperm.xlu0 %760, %v758
    %v762 = vpop.permute.xlu0 %761
    %v764 = vrot.slane %v129, 2
    %v766 = vmul.f32 %v762, %v764
    %v767 = vadd.f32 %v752, %v766
    %v768 = vrot.slane %v132, 2
    %v770 = vmul.f32 %v762, %v768
    %v771 = vadd.f32 %v757, %v770
    %v772 = vtanh.pop %v767
    %774 = vset.pattern.permute.xlu0 3
    %775 = vperm.xlu0 %774, %v772
    %v776 = vpop.permute.xlu0 %775
    %v778 = vrot.slane %v129, 3
    %v780 = vmul.f32 %v776, %v778
    %v781 = vadd.f32 %v767, %v780
    %v782 = vrot.slane %v132, 3
    %v784 = vmul.f32 %v776, %v782
    %v785 = vadd.f32 %v771, %v784
    %v786 = vtanh.pop %v781
    %788 = vset.pattern.permute.xlu0 4
    %789 = vperm.xlu0 %788, %v786
    %v790 = vpop.permute.xlu0 %789
    %v792 = vrot.slane %v129, 4
    %v794 = vmul.f32 %v790, %v792
    %v795 = vadd.f32 %v781, %v794
    %v796 = vrot.slane %v132, 4
    %v798 = vmul.f32 %v790, %v796
    %v799 = vadd.f32 %v785, %v798
    %v800 = vtanh.pop %v795
    %802 = vset.pattern.permute.xlu0 5
    %803 = vperm.xlu0 %802, %v800
    %v804 = vpop.permute.xlu0 %803
    %v806 = vrot.slane %v129, 5
    %v808 = vmul.f32 %v804, %v806
    %v809 = vadd.f32 %v795, %v808
    %v810 = vrot.slane %v132, 5
    %v812 = vmul.f32 %v804, %v810
    %v813 = vadd.f32 %v799, %v812
    %v814 = vtanh.pop %v809
    %816 = vset.pattern.permute.xlu0 6
    %817 = vperm.xlu0 %816, %v814
    %v818 = vpop.permute.xlu0 %817
    %v820 = vrot.slane %v129, 6
    %v822 = vmul.f32 %v818, %v820
    %v823 = vadd.f32 %v809, %v822
    %v824 = vrot.slane %v132, 6
    %v826 = vmul.f32 %v818, %v824
    %v827 = vadd.f32 %v813, %v826
    %v828 = vtanh.pop %v823
    %830 = vset.pattern.permute.xlu0 7
    %831 = vperm.xlu0 %830, %v828
    %v832 = vpop.permute.xlu0 %831
    %v834 = vrot.slane %v132, 7
    %v836 = vmul.f32 %v832, %v834
    %v837 = vadd.f32 %v827, %v836
    %vm838 = vcmask 73728
    %839 = vst.msk [vmem:[#allocation14] sm:$0x1] %vm838, %v837
    // Predicated region
    $region62: #{tpu_custom_call.1} parent=1 // pred_check
      _
    $region63: #{tpu_custom_call.1} parent=1 // pred_check_branch
      %841 = sbr.rel (0) target = $region65
    $region64: #{tpu_custom_call.1} parent=1 // pred_region
      %843 = vsyncadd [#allocation4], 0
      %s845 = sshll.u32 [#allocation14], 4
      %s846 = int_to_ptr.vmem [resolvable:$true] %s845
      %s847 = sshll.u32 %s8, 4
      %s848 = int_to_ptr.hbm [resolvable:$true] %s847
      %850 = dma.vmem_to_hbm [thread:$0]  %s846, 16, %s848, [#allocation4]
    $region65: #{tpu_custom_call.1} parent=1 // pred_fallthru
      _
    // Predicated region
    $region66: #{tpu_custom_call.1} parent=1 // pred_check
      _
    $region67: #{tpu_custom_call.1} parent=1 // pred_check_branch
      %852 = sbr.rel (0) target = $region69
    $region68: #{tpu_custom_call.1} parent=1 // pred_region
      %854 = dma.done [#allocation4], 16
    $region69: #{tpu_custom_call.1} parent=1 // pred_fallthru
      _
    %855 = vsyncpa [#allocation3], 1
    %856 = vsyncpa [#allocation6], 1
    %857 = vsyncpa [#allocation9], 1
    %858 = vsyncpa [#allocation12], 1
    %859 = vsyncpa [#allocation4], 1

</llo_original>
